<compile_context>
chip_gen: v7x
topology: tpu7x:2x2x1
jax: 0.10.0
libtpu: 0.0.40
codegen_flags: <defaults>
</compile_context>

<pallas_src>
import jax
import jax.numpy as jnp
from jax.experimental import pallas as pl
from jax.experimental.pallas import tpu as pltpu

EPS = 1e-5  # nn.InstanceNorm1d default eps


def _round_up(x, m):
    return ((x + m - 1) // m) * m


def _vmem_capacity_bytes():
    """Per-core VMEM capacity; conservative fallback if query unavailable."""
    try:
        info = pltpu.get_tpu_info()
        cap = getattr(info, "vmem_capacity_bytes", None)
        if cap:
            return int(cap)
    except Exception:
        pass
    return 64 * 1024 * 1024  # v7x-sized fallback (safe on all generations)


def _make_kernel(TB, TC, nb, nc, resident):
    def body(x_ref, sb, o_ref):
        # x_ref: (TB, TC, L), sb: (TB, TC, 2) f32 [scale, bias], o_ref: (TB, TC, L)
        x = x_ref[...]
        xf = x.astype(jnp.float32)
        inv_l = jnp.float32(1.0 / x.shape[-1])

        # Two-pass moments over L (biased variance, matches InstanceNorm1d;
        # avoids E[x^2]-E[x]^2 cancellation). Block is VMEM-resident so the
        # extra pass costs VPU only, no HBM traffic.
        mean = jnp.sum(xf, axis=-1, keepdims=True) * inv_l          # (TB, TC, 1)
        centered = xf - mean
        var = jnp.sum(centered * centered, axis=-1, keepdims=True) * inv_l
        rstd = jax.lax.rsqrt(var + EPS)

        scale = sb[..., 0:1]                                        # (TB, TC, 1) f32
        bias = sb[..., 1:2]
        a = rstd * scale                                            # f32
        b = bias - mean * a                                         # f32

        if o_ref.dtype == jnp.float32:
            o_ref[...] = xf * a + b
        else:
            # a/b computed in f32, final FMA in the native (bf16/fp16) dtype.
            o_ref[...] = (x * a.astype(x.dtype) + b.astype(x.dtype)).astype(o_ref.dtype)

    if resident:
        def kernel(x_ref, sb_ref, o_ref):
            bidx = (pl.ds(pl.multiple_of(pl.program_id(0) * TB, TB), TB)
                    if nb > 1 else slice(None))
            cidx = (pl.ds(pl.multiple_of(pl.program_id(1) * TC, TC), TC)
                    if nc > 1 else slice(None))
            body(x_ref, sb_ref[bidx, cidx, :], o_ref)
    else:
        def kernel(x_ref, sb_ref, o_ref):
            body(x_ref, sb_ref[...], o_ref)

    return kernel


def _choose_tiles(B, C, L, itemsize, block_budget, sub):
    """Pick (TB, TC); L stays whole (reduction axis, lane-dense)."""
    row_bytes = _round_up(L, 128) * itemsize              # one padded (1,1,L) row
    full_c_bytes = _round_up(C, sub) * row_bytes          # one (1,C,L) slab

    if full_c_bytes <= block_budget:
        # Full C per block; pack as many batch rows as the budget allows.
        TC = C
        TB = max(1, min(B, block_budget // max(full_c_bytes, 1)))
    else:
        # Tile channels: largest sub-aligned TC under the budget (ragged OK).
        TB = 1
        tc_rows = max(sub, (block_budget // max(row_bytes, 1)) // sub * sub)
        TC = min(C, tc_rows)
        # TODO(synk): for L so large that even a (1, sub, L) block blows the
        # budget, tile L with an accumulator pass instead of oversizing VMEM.

    # Megacore (v7x has 2 TensorCores): keep at least 2 blocks in the grid.
    if pl.cdiv(B, TB) * pl.cdiv(C, TC) < 2:
        if B >= 2:
            TB = -(-B // 2)
        elif C > sub:
            TC = max(sub, _round_up(-(-C // 2), sub))
    return TB, TC


def adain_pallas(x, style, w_scale, b_scale, w_bias, b_bias, lr_mul=1.0):
    """x: (B, C, L), style: (B, S), w_*: (C, S), b_*: (C,)."""
    B, C, L = x.shape
    S = style.shape[1]
    eq_scale = (1.0 / float(S) ** 0.5) * lr_mul

    # --- Hoisted, fused EqualLinear projections: one (B,S)@(S,2C) matmul. ---
    # TODO(synk): precompute w_cat/b_cat at parameter-load time in a real model
    # to avoid the small per-call concat/cast HLOs.
    w_cat = jnp.concatenate([w_scale, w_bias], axis=0).astype(jnp.float32)       # (2C, S)
    b_cat = jnp.concatenate([b_scale, b_bias], axis=0).astype(jnp.float32)       # (2C,)
    sb_flat = style.astype(jnp.float32) @ (w_cat * eq_scale).T + b_cat * lr_mul  # (B, 2C)
    sb = jnp.stack([sb_flat[:, :C], sb_flat[:, C:]], axis=-1)                    # (B, C, 2)

    itemsize = jnp.dtype(x.dtype).itemsize
    sub = {4: 8, 2: 16, 1: 32}.get(itemsize, 8)           # dtype-aware sublane quantum

    # --- Generation-aware VMEM budget (v5e/v6e: 128 MiB, v7x: 64 MiB/core). ---
    vmem_cap = _vmem_capacity_bytes()
    vmem_limit = int(vmem_cap * 0.6)                      # ~76 MiB v5e/v6e, ~38 MiB v7x
    # Live blocks: 2x double-buffered x + 2x double-buffered out + f32 temps.
    divisor = 5 if itemsize >= 4 else 8
    block_budget = min(vmem_limit // divisor, 8 * 1024 * 1024)

    TB, TC = _choose_tiles(B, C, L, itemsize, block_budget, sub)
    nb, nc = pl.cdiv(B, TB), pl.cdiv(C, TC)
    Bp, Cp = nb * TB, nc * TC

    # --- scale/bias: VMEM-resident for the whole grid when the padded copy is cheap. ---
    sb_resident_bytes = Bp * _round_up(Cp, 8) * 128 * 4   # f32, lane-padded layout
    resident = sb_resident_bytes <= 2 * 1024 * 1024
    if resident:
        if (Bp, Cp) != (B, C):
            sb = jnp.pad(sb, ((0, Bp - B), (0, Cp - C), (0, 0)))
        sb_spec = pl.BlockSpec((Bp, Cp, 2), lambda bi, ci: (0, 0, 0))  # fetched once
        sb_bytes = sb_resident_bytes
    else:
        sb_spec = pl.BlockSpec((TB, TC, 2), lambda bi, ci: (bi, ci, 0))
        sb_bytes = TB * _round_up(TC, 8) * 128 * 4

    # Safety net: never hand the compiler a limit smaller than what the chosen
    # blocks need (large C*L fallbacks), but never exceed physical capacity.
    x_block_bytes = TB * _round_up(TC, sub) * _round_up(L, 128) * itemsize
    needed = divisor * x_block_bytes + 2 * sb_bytes + (2 << 20)
    vmem_limit = min(vmem_cap, max(vmem_limit, needed))

    kernel = _make_kernel(TB, TC, nb, nc, resident)

    return pl.pallas_call(
        kernel,
        out_shape=jax.ShapeDtypeStruct((B, C, L), x.dtype),
        grid_spec=pltpu.PrefetchScalarGridSpec(
            num_scalar_prefetch=0,
            grid=(nb, nc),
            in_specs=[
                pl.BlockSpec((TB, TC, L), lambda bi, ci: (bi, ci, 0)),  # x
                sb_spec,                                                # stacked scale/bias
            ],
            out_specs=pl.BlockSpec((TB, TC, L), lambda bi, ci: (bi, ci, 0)),
        ),
        compiler_params=pltpu.CompilerParams(
            dimension_semantics=("parallel", "parallel"),
            vmem_limit_bytes=int(vmem_limit),
        ),
    )(x, sb)


def adain_reference(x, style, w_scale, b_scale, w_bias, b_bias, lr_mul=1.0):
    S = style.shape[1]
    eq_scale = (1.0 / float(S) ** 0.5) * lr_mul
    scale = style @ (w_scale * eq_scale).T + b_scale * lr_mul   # (B, C)
    bias = style @ (w_bias * eq_scale).T + b_bias * lr_mul      # (B, C)
    mean = jnp.mean(x, axis=-1, keepdims=True)
    var = jnp.mean((x - mean) ** 2, axis=-1, keepdims=True)
    normalized = (x - mean) / jnp.sqrt(var + EPS)
    return normalized * scale[:, :, None] + bias[:, :, None]


if __name__ == "__main__":
    B, C, S, L = 2, 8, 16, 128  # batch, feature_dim, style_dim, sequence length
    key = jax.random.PRNGKey(0)
    k1, k2, k3, k4 = jax.random.split(key, 4)

    x = jax.random.normal(k1, (B, C, L), dtype=jnp.float32)
    style = jax.random.normal(k2, (B, S), dtype=jnp.float32)

    # Parameter init mirroring EqualLinear.__init__:
    # weight ~ randn(out_dim, in_dim) / lr_mul ; bias = zeros(out_dim) + bias_init
    lr_mul = 1.0
    w_scale = jax.random.normal(k3, (C, S), dtype=jnp.float32) / lr_mul
    w_bias = jax.random.normal(k4, (C, S), dtype=jnp.float32) / lr_mul
    b_scale = jnp.zeros((C,), dtype=jnp.float32)
    b_bias = jnp.zeros((C,), dtype=jnp.float32)

    out = adain_pallas(x, style, w_scale, b_scale, w_bias, b_bias, lr_mul)
    out = jax.block_until_ready(out)

    ref = adain_reference(x, style, w_scale, b_scale, w_bias, b_bias, lr_mul)
    assert out.shape == (B, C, L)
    assert jnp.allclose(out, ref, atol=1e-4, rtol=1e-4), "mismatch vs reference"

    print("KERNEL_OK")
</pallas_src>

<mosaic_0001>
module attributes {stable_mosaic.version = 11 : i64} {
  func.func @kernel(%arg0: i32, %arg1: i32, %arg2: memref<1x8x128xf32, #tpu.memory_space<vmem>>, %arg3: memref<2x8x2xf32, #tpu.memory_space<vmem>>, %arg4: memref<1x8x128xf32, #tpu.memory_space<vmem>>) attributes {dimension_semantics = [#tpu.dimension_semantics<parallel>, #tpu.dimension_semantics<parallel>], iteration_bounds = array<i64: 2, 1>, scalar_prefetch = 0 : i64, scratch_operands = 0 : i64, tpu.core_type = #tpu.core_type<tc>, window_params = [{transform_indices = @transform_0, window_bounds = array<i64: 1, 8, 128>}, {pipeline_mode = #tpu.pipeline_mode<synchronous>, transform_indices = @transform_1, window_bounds = array<i64: 2, 8, 2>}, {transform_indices = @transform_2, window_bounds = array<i64: 1, 8, 128>}]} {
    %c1_i32 = arith.constant 1 : i32
    %0 = arith.muli %arg0, %c1_i32 : i32
    %1 = tpu.assume_multiple %0, 1 : i32
    %2 = arith.index_cast %1 : i32 to index
    %c0 = arith.constant 0 : index
    %c0_0 = arith.constant 0 : index
    %3 = vector.load %arg3[%2, %c0, %c0_0] : memref<2x8x2xf32, #tpu.memory_space<vmem>>, vector<1x8x2xf32>
    %c0_1 = arith.constant 0 : index
    %c0_2 = arith.constant 0 : index
    %c0_3 = arith.constant 0 : index
    %4 = vector.load %arg2[%c0_1, %c0_2, %c0_3] : memref<1x8x128xf32, #tpu.memory_space<vmem>>, vector<1x8x128xf32>
    %cst = arith.constant dense<0.000000e+00> : vector<1x8xf32>
    %5 = vector.multi_reduction <add>, %4, %cst [2] : vector<1x8x128xf32> to vector<1x8xf32>
    %6 = vector.shape_cast %5 : vector<1x8xf32> to vector<1x8x1xf32>
    %cst_4 = arith.constant 7.812500e-03 : f32
    %7 = vector.broadcast %cst_4 : f32 to vector<1x8x1xf32>
    %8 = arith.mulf %6, %7 : vector<1x8x1xf32>
    %9 = vector.broadcast %8 : vector<1x8x1xf32> to vector<1x8x128xf32>
    %10 = arith.subf %4, %9 : vector<1x8x128xf32>
    %11 = arith.mulf %10, %10 : vector<1x8x128xf32>
    %cst_5 = arith.constant dense<0.000000e+00> : vector<1x8xf32>
    %12 = vector.multi_reduction <add>, %11, %cst_5 [2] : vector<1x8x128xf32> to vector<1x8xf32>
    %13 = vector.shape_cast %12 : vector<1x8xf32> to vector<1x8x1xf32>
    %cst_6 = arith.constant 7.812500e-03 : f32
    %14 = vector.broadcast %cst_6 : f32 to vector<1x8x1xf32>
    %15 = arith.mulf %13, %14 : vector<1x8x1xf32>
    %cst_7 = arith.constant 9.99999974E-6 : f32
    %16 = vector.broadcast %cst_7 : f32 to vector<1x8x1xf32>
    %17 = arith.addf %15, %16 : vector<1x8x1xf32>
    %18 = math.rsqrt %17 : vector<1x8x1xf32>
    %19 = vector.extract_strided_slice %3 {offsets = [0, 0, 0], sizes = [1, 8, 1], strides = [1, 1, 1]} : vector<1x8x2xf32> to vector<1x8x1xf32>
    %20 = vector.extract_strided_slice %3 {offsets = [0, 0, 1], sizes = [1, 8, 1], strides = [1, 1, 1]} : vector<1x8x2xf32> to vector<1x8x1xf32>
    %21 = arith.mulf %18, %19 : vector<1x8x1xf32>
    %22 = arith.mulf %8, %21 : vector<1x8x1xf32>
    %23 = arith.subf %20, %22 : vector<1x8x1xf32>
    %24 = vector.broadcast %21 : vector<1x8x1xf32> to vector<1x8x128xf32>
    %25 = arith.mulf %4, %24 : vector<1x8x128xf32>
    %26 = vector.broadcast %23 : vector<1x8x1xf32> to vector<1x8x128xf32>
    %27 = arith.addf %25, %26 : vector<1x8x128xf32>
    %c0_8 = arith.constant 0 : index
    %c0_9 = arith.constant 0 : index
    %c0_10 = arith.constant 0 : index
    %28 = vector.load %arg4[%c0_8, %c0_9, %c0_10] : memref<1x8x128xf32, #tpu.memory_space<vmem>>, vector<1x8x128xf32>
    tpu.vector_store %arg4[%c0_8, %c0_9, %c0_10], %27 {strides = array<i32>} : memref<1x8x128xf32, #tpu.memory_space<vmem>>, vector<1x8x128xf32>,
    return
  }
  func.func @transform_0(%arg0: i32, %arg1: i32) -> (i32, i32, i32) {
    %c0_i32 = arith.constant 0 : i32
    %c0_i32_0 = arith.constant 0 : i32
    return %arg0, %arg1, %c0_i32 : i32, i32, i32
  }
  func.func @transform_1(%arg0: i32, %arg1: i32) -> (i32, i32, i32) {
    %c0_i32 = arith.constant 0 : i32
    %c0_i32_0 = arith.constant 0 : i32
    %c0_i32_1 = arith.constant 0 : i32
    %c0_i32_2 = arith.constant 0 : i32
    return %c0_i32, %c0_i32_0, %c0_i32_1 : i32, i32, i32
  }
  func.func @transform_2(%arg0: i32, %arg1: i32) -> (i32, i32, i32) {
    %c0_i32 = arith.constant 0 : i32
    %c0_i32_0 = arith.constant 0 : i32
    return %arg0, %arg1, %c0_i32 : i32, i32, i32
  }
}

</mosaic_0001>

<llo_original>
// kernel: tpu_custom_call.1
$region0: #{tpu_custom_call.1}
  #allocation0 [shape = 'u32[]', space=smem, size = 0x4, offset = 0x4, fixed_abs, tag = 'smem constant byte address 0x4 - core index']
  #allocation1 [shape = 'u32[144,128]{1,0:T(1,128)}', space=vmem, size = 0x12000, scoped, tag = 'internal scratch']
  %s0 = inlined_call_operand.vmem [shape: f32[2,8,128], index: 0, kind: input, shape index: {}]
  %s1 = inlined_call_operand.vmem [shape: f32[2,8,2], index: 1, kind: input, shape index: {}]
  %s2 = inlined_call_operand.hbm [shape: f32[2,8,128], index: 2, kind: output, shape index: {}]
  %s3 = sld [smem:[#allocation0]]
  $region41: #{tpu_custom_call.1} parent=0
    _
  %s5 = ssub.s32 1, %s3
  %s6 = scalar_select 0, %s5, %s3
  $region1: #{tpu_custom_call.1} parent=0
    #allocation2 [shape = 'u8[8192]{0}', space=vmem, size = 0x2000, scoped, tag = 'output window, operand 0']
    #allocation3 [shape = 's32[2]{0}', space=sflag, size = 0x8, scoped, tag = 'scoped memory for tpu_custom_call.1']
    %7 = vsyncpa [#allocation3], 0
    %s8 = scalar_lea.sflag [#allocation3], 1
    %9 = vsyncpa %s8, 0
    loop: start=0, step=1, limit=4
    $region2: #{tpu_custom_call.1} parent=1 // loop_pre_header
      _
    $region3: #{tpu_custom_call.1} parent=1 // loop_header
      %s11 = sphi 0, %s15
      %p12 = scmp.ge.s32.totalorder %s11, 4
      %s18 = sphi 0, %s30
      %s19 = sphi 0, %s26
      %s20 = sphi 0, %s18
      %s21 = sphi 0, %s19
      %s22 = sphi 0, %s20
      %s23 = sphi 0, %s21
      %s35 = sphi 0, %s37
      %s38 = sphi 0, %s35
      %s39 = sphi 0, %s38
      %s55 = sphi 0, %s39
      %s59 = sphi 0, %s59
      %s61 = sphi 0, %s59
      %s62 = sphi 0, %s61
      %s76 = sphi 0, %s62
      %s84 = sphi 0, %s86
      %s87 = sphi 0, %s84
      %s88 = sphi 0, %s87
      %s104 = sphi 0, %s88
    $region4: #{tpu_custom_call.1} parent=1 // loop_header_branch
      %14 = sbr.rel (%p12) target = $region8
    $region5: #{tpu_custom_call.1} parent=1 // loop_body
      %s16 = ssub.s32 %s11, 1
      %s17 = ssub.s32 %s11, 2
      %s24 = sadd.s32 1, %s19
      %p25 = scmp.ge.s32.totalorder %s24, 1
      %s26 = scalar_select %p25, 0, %s24
      %s27 = sadd.s32 1, %s18
      %s28 = scalar_select %p25, %s27, %s18
      %p29 = scmp.ge.s32.totalorder %s28, 2
      %s30 = scalar_select %p29, 0, %s28
      %s31 = ssub.s32 %s18, %s30
      %s32 = ssub.s32 %s19, %s26
      %s33 = sor.u32 %s31, %s32
      %p34 = scmp.eq.s32.totalorder %s33, 0
      %s36 = sadd.s32 %s35, 1
      %s37 = scalar_select %p34, %s35, %s36
      %p40 = pneg %p34
      %p41 = scmp.eq.s32.totalorder %s11, 1
      %p42 = por %p40, %p41
      %p43 = scmp.ne.s32.totalorder %s35, %s38
      %p44 = scmp.eq.s32.totalorder %s11, 0
      %p45 = por %p43, %p44
      %p46 = scmp.ne.s32.totalorder %s35, %s38
      %p47 = scmp.eq.s32.totalorder %s16, 1
      %p48 = por %p46, %p47
      %p49 = scmp.ne.s32.totalorder %s38, %s39
      %p50 = scmp.eq.s32.totalorder %s16, 0
      %p51 = por %p49, %p50
      %p52 = scmp.ne.s32.totalorder %s38, %s39
      %p53 = scmp.eq.s32.totalorder %s17, 1
      %p54 = por %p52, %p53
      %p56 = scmp.ne.s32.totalorder %s39, %s55
      %p57 = scmp.eq.s32.totalorder %s17, 0
      %p58 = por %p56, %p57
      %s60 = sadd.s32 %s59, 1
      %p63 = scmp.eq.s32.totalorder %s11, 1
      %p64 = scmp.ne.s32.totalorder %s59, %s61
      %p65 = scmp.eq.s32.totalorder %s11, 0
      %p66 = por %p64, %p65
      %p67 = scmp.ne.s32.totalorder %s59, %s61
      %p68 = scmp.eq.s32.totalorder %s16, 1
      %p69 = por %p67, %p68
      %p70 = scmp.ne.s32.totalorder %s61, %s62
      %p71 = scmp.eq.s32.totalorder %s16, 0
      %p72 = por %p70, %p71
      %p73 = scmp.ne.s32.totalorder %s61, %s62
      %p74 = scmp.eq.s32.totalorder %s17, 1
      %p75 = por %p73, %p74
      %p77 = scmp.ne.s32.totalorder %s62, %s76
      %p78 = scmp.eq.s32.totalorder %s17, 0
      %p79 = por %p77, %p78
      %s80 = ssub.s32 %s18, %s30
      %s81 = ssub.s32 %s19, %s26
      %s82 = sor.u32 %s80, %s81
      %p83 = scmp.eq.s32.totalorder %s82, 0
      %s85 = sadd.s32 %s84, 1
      %s86 = scalar_select %p83, %s84, %s85
      %p89 = pneg %p83
      %p90 = scmp.eq.s32.totalorder %s11, 1
      %p91 = por %p89, %p90
      %p92 = scmp.ne.s32.totalorder %s84, %s87
      %p93 = scmp.eq.s32.totalorder %s11, 0
      %p94 = por %p92, %p93
      %p95 = scmp.ne.s32.totalorder %s84, %s87
      %p96 = scmp.eq.s32.totalorder %s16, 1
      %p97 = por %p95, %p96
      %p98 = scmp.ne.s32.totalorder %s87, %s88
      %p99 = scmp.eq.s32.totalorder %s16, 0
      %p100 = por %p98, %p99
      %p101 = scmp.ne.s32.totalorder %s87, %s88
      %p102 = scmp.eq.s32.totalorder %s17, 1
      %p103 = por %p101, %p102
      %p105 = scmp.ne.s32.totalorder %s88, %s104
      %p106 = scmp.eq.s32.totalorder %s17, 0
      %p107 = por %p105, %p106
      %p108 = scmp.le.s32.totalorder 1, %s11
      %p109 = scmp.lt.s32.totalorder %s11, 3
      %p110 = pnand %p108, %p109
      %p111 = pneg %p110
      // Predicated region
      $region9: #{tpu_custom_call.1} parent=5 // pred_check
        _
      $region10: #{tpu_custom_call.1} parent=5 // pred_check_branch
        %113 = sbr.rel (%p110) target = $region12
      $region11: #{tpu_custom_call.1} parent=5 // pred_region
        %s114 = ssub.s32 %s11, 1
        // Predicated region
        $region13: #{tpu_custom_call.1} parent=11 // pred_check
          %p115 = pneg %p72
        $region14: #{tpu_custom_call.1} parent=11 // pred_check_branch
          %117 = sbr.rel (%p115) target = $region16
        $region15: #{tpu_custom_call.1} parent=11 // pred_region
          _
        $region16: #{tpu_custom_call.1} parent=11 // pred_fallthru
          _
      $region12: #{tpu_custom_call.1} parent=5 // pred_fallthru
        _
      %p118 = scmp.lt.s32.totalorder %s11, 2
      // Predicated region
      $region17: #{tpu_custom_call.1} parent=5 // pred_check
        %p119 = pneg %p118
      $region18: #{tpu_custom_call.1} parent=5 // pred_check_branch
        %121 = sbr.rel (%p119) target = $region20
      $region19: #{tpu_custom_call.1} parent=5 // pred_region
        // Predicated region
        $region21: #{tpu_custom_call.1} parent=19 // pred_check
          %p122 = pneg %p45
        $region22: #{tpu_custom_call.1} parent=19 // pred_check_branch
          %124 = sbr.rel (%p122) target = $region24
        $region23: #{tpu_custom_call.1} parent=19 // pred_region
          %p125 = scmp.lt.s32.totalorder %s18, 1
          %s126 = scalar_select %p125, %s18, 1
          %p127 = scmp.lt.s32.totalorder %s19, 0
          %s128 = scalar_select %p127, %s19, 0
          %s129 = sadd.s32 %s128, %s126
          %s130 = smul.addr %s129, 8
          %s131 = scalar_lea.vmem %s0, %s130
        $region24: #{tpu_custom_call.1} parent=19 // pred_fallthru
          _
      $region20: #{tpu_custom_call.1} parent=5 // pred_fallthru
        _
      %p132 = scmp.le.s32.totalorder 1, %s11
      %p133 = scmp.lt.s32.totalorder %s11, 3
      %p134 = pnand %p132, %p133
      %p135 = pneg %p134
      // Predicated region
      $region25: #{tpu_custom_call.1} parent=5 // pred_check
        _
      $region26: #{tpu_custom_call.1} parent=5 // pred_check_branch
        %137 = sbr.rel (%p134) target = $region28
      $region27: #{tpu_custom_call.1} parent=5 // pred_region
        %s138 = ssub.s32 %s11, 1
        %p139 = scmp.lt.s32.totalorder %s20, 1
        %s140 = scalar_select %p139, %s20, 1
        %p141 = scmp.lt.s32.totalorder %s21, 0
        %s142 = scalar_select %p141, %s21, 0
        %s143 = sadd.s32 %s142, %s140
        %s144 = smul.addr %s143, 8
        %s145 = scalar_lea.vmem %s0, %s144
        %p146 = pneg %p51
        %p147 = pneg %p48
        %p148 = pneg %p72
        %p149 = pneg %p69
        %p150 = pneg %p100
        %p151 = pneg %p97
        %s152 = sand.u32 %s87, 1
        %s153 = scalar_lea.sflag [#allocation3], %s152
        %s154 = sand.u32 %s87, 1
        %s155 = smul.addr %s154, 8
        %s156 = scalar_lea.vmem [#allocation2], %s155
        %p157 = scmp.lt.s32.totalorder %s20, 1
        %s158 = scalar_select %p157, %s20, 1
        %p159 = scmp.lt.s32.totalorder %s21, 0
        %s160 = scalar_select %p159, %s21, 0
        %s161 = sadd.s32 %s160, %s158
        %s162 = smul.addr %s161, 8
        %s163 = scalar_lea.vmem %s0, %s162
        %s164 = smul.u32 %s20, 8
        %s165 = scalar_lea.vmem %s1, %s164
        %v166 = vld [vmem:[%s165] sm:$0xff]
        %v167 = vld [vmem:[%s163] sm:$0xff]
        %168 = vadd.xlane.f32.xlu0 %v167
        %v169 = vpop.xlane.xlu0 %168
        %v170 = vmul.f32 %v169, 0.0078125
        %v171 = vsub.f32 %v167, %v170
        %v172 = vmul.f32 %v171, %v171
        %173 = vadd.xlane.f32.xlu0 %v172
        %v174 = vpop.xlane.xlu0 %173
        %v175 = vmul.f32 %v174, 0.0078125
        %v176 = vadd.f32 %v175, 1e-05
        %v177 = vrsqrt.pop %v176
        %v178 = vmul.f32 %v177, %v166
        %v179 = vmul.f32 %v170, %v178
        %181 = vrot.lane.b32.xlu0 %v179, 1
        %v182 = vpop.permute.xlu0 %181
        %v184 = vsub.f32 %v166, %v182
        %186 = vset.pattern.permute.xlu0 0
        %187 = vperm.xlu0 %186, %v178
        %v188 = vpop.permute.xlu0 %187
        %v190 = vmul.f32 %v167, %v188
        %192 = vset.pattern.permute.xlu0 1
        %193 = vperm.xlu0 %192, %v184
        %v194 = vpop.permute.xlu0 %193
        %v196 = vadd.f32 %v190, %v194
        %197 = vst [vmem:[%s156] sm:$0xff] %v196
        %s198 = sand.u32 %s87, 1
        %s199 = scalar_lea.sflag [#allocation3], %s198
        %s200 = sand.u32 %s87, 1
        %s201 = smul.addr %s200, 8
        %s202 = scalar_lea.vmem [#allocation2], %s201
        // Predicated region
        $region29: #{tpu_custom_call.1} parent=27 // pred_check
          %p203 = pneg %p97
        $region30: #{tpu_custom_call.1} parent=27 // pred_check_branch
          %205 = sbr.rel (%p203) target = $region32
        $region31: #{tpu_custom_call.1} parent=27 // pred_region
          %s207 = ssub.s32 128, 128
          %208 = vsyncadd %s199, %s207
          %s209 = sadd.s32 %s21, %s20
          %s210 = smul.addr %s209, 128
          %s211 = scalar_lea.hbm %s2, %s210
          %s213 = sshll.u32 %s202, 4
          %s214 = int_to_ptr.vmem [resolvable:$true] %s213
          %216 = dma.vmem_to_hbm [thread:$0]  %s214, 128, %s211, %s199
        $region32: #{tpu_custom_call.1} parent=27 // pred_fallthru
          _
      $region28: #{tpu_custom_call.1} parent=5 // pred_fallthru
        _
      %p217 = scmp.le.s32.totalorder 2, %s11
      // Predicated region
      $region33: #{tpu_custom_call.1} parent=5 // pred_check
        %p218 = pneg %p217
      $region34: #{tpu_custom_call.1} parent=5 // pred_check_branch
        %220 = sbr.rel (%p218) target = $region36
      $region35: #{tpu_custom_call.1} parent=5 // pred_region
        %s221 = ssub.s32 %s11, 2
        // Predicated region
        $region37: #{tpu_custom_call.1} parent=35 // pred_check
          %p222 = pneg %p103
        $region38: #{tpu_custom_call.1} parent=35 // pred_check_branch
          %224 = sbr.rel (%p222) target = $region40
        $region39: #{tpu_custom_call.1} parent=35 // pred_region
          %s225 = sand.u32 %s88, 1
          %s226 = scalar_lea.sflag [#allocation3], %s225
          %s227 = sand.u32 %s88, 1
          %s228 = smul.addr %s227, 8
          %s229 = scalar_lea.vmem [#allocation2], %s228
          %230 = dma.done %s226, 128
        $region40: #{tpu_custom_call.1} parent=35 // pred_fallthru
          _
      $region36: #{tpu_custom_call.1} parent=5 // pred_fallthru
        _
    $region6: #{tpu_custom_call.1} parent=1 // loop_footer
      %s15 = sadd.s32 1, %s11
    $region7: #{tpu_custom_call.1} parent=1 // loop_footer_branch
      %10 = sbr.rel target = $region3
    $region8: #{tpu_custom_call.1} parent=1 // loop_exit
      _
    %231 = vsyncpa [#allocation3], 1
    %s232 = scalar_lea.sflag [#allocation3], 1
    %233 = vsyncpa %s232, 1

</llo_original>
